<compile_context>
chip_gen: v6e
topology: v6e:2x2x1
jax: 0.10.0
libtpu: 0.0.40
codegen_flags: <defaults>
</compile_context>

<pallas_src>
import functools

import jax
import jax.numpy as jnp
from jax import lax
from jax.experimental import pallas as pl
from jax.experimental.pallas import tpu as pltpu


def _make_layernorm_kernel(eps: float, d_model: int):
    inv_n = 1.0 / d_model
    inv_nm1 = 1.0 / (d_model - 1) if d_model > 1 else 1.0

    def layernorm_kernel(x_ref, o_ref):
        # x_ref block: (TR, D) rows of tokens, D on the lane axis.
        x = x_ref[...].astype(jnp.float32)
        # Single-pass moments: two independent cross-lane reductions.
        s1 = jnp.sum(x, axis=-1, keepdims=True)
        s2 = jnp.sum(x * x, axis=-1, keepdims=True)
        mu = s1 * inv_n
        # Unbiased variance, matching torch.std() default: (sumsq - n*mu^2)/(n-1)
        var_unbiased = (s2 - s1 * mu) * inv_nm1
        out = (x - mu) * lax.rsqrt(var_unbiased + eps)
        o_ref[...] = out.astype(o_ref.dtype)

    return layernorm_kernel


def _round_up(v: int, m: int) -> int:
    return ((v + m - 1) // m) * m


def _pick_row_tile(rows: int, d_model: int, itemsize: int) -> int:
    """Row-tile size: multiple of the sublane packing, capped by VMEM budget."""
    sublane = 16 if itemsize < 4 else 8
    # Keep each in/out buffer <= ~6 MiB so (2 in + 2 out) double-buffered tiles
    # plus the f32 working copy stay well under v7x's 64 MiB / v5e scoped VMEM.
    budget_bytes = 6 * 1024 * 1024
    bytes_per_row = max(1, d_model * itemsize)
    tr_mem = max(sublane, (budget_bytes // bytes_per_row) // sublane * sublane)
    tr = min(512, tr_mem, _round_up(rows, sublane))
    return max(sublane, tr)


@functools.partial(jax.jit, static_argnames=("eps",))
def encoder_forward(x, src_mask=None, *, eps: float = 1e-6,
                    alpha=None, bias=None):
    """Pallas implementation of Encoder.forward.

    Encoder block layers are identity (class not provided); the final
    LayerNormalisation runs in a Pallas kernel tiled over flattened tokens.
    `alpha`/`bias` mirror the PyTorch parameters but (as in the reference
    forward) are not applied.
    """
    B, S, D = x.shape
    rows = B * S
    x2d = x.reshape(rows, D)

    tr = _pick_row_tile(rows, D, jnp.dtype(x.dtype).itemsize)
    grid = (pl.cdiv(rows, tr),)
    kernel = _make_layernorm_kernel(eps, D)

    out2d = pl.pallas_call(
        kernel,
        out_shape=jax.ShapeDtypeStruct((rows, D), x.dtype),
        grid_spec=pltpu.PrefetchScalarGridSpec(
            num_scalar_prefetch=0,
            grid=grid,
            in_specs=[pl.BlockSpec((tr, D), lambda i: (i, 0))],
            out_specs=pl.BlockSpec((tr, D), lambda i: (i, 0)),
        ),
        compiler_params=pltpu.CompilerParams(
            dimension_semantics=("parallel",),
            vmem_limit_bytes=64 * 1024 * 1024,
        ),
    )(x2d)

    return out2d.reshape(B, S, D)


def _reference(x, eps=1e-6):
    x = x.astype(jnp.float32)
    mu = jnp.mean(x, axis=-1, keepdims=True)
    var = jnp.var(x, axis=-1, keepdims=True, ddof=1)  # unbiased, like torch.std
    return (x - mu) / jnp.sqrt(var + eps)


if __name__ == "__main__":
    key = jax.random.PRNGKey(0)

    # Small shapes consistent with (Batch, seq_len, d_model)
    B, S, D = 2, 8, 32
    x = jax.random.normal(key, (B, S, D), dtype=jnp.float32)
    src_mask = jnp.ones((B, 1, S, S), dtype=jnp.float32)  # unused by the norm

    # Parameters as created in LayerNormalisation.__init__; intentionally
    # unused in forward, matching the reference module.
    alpha = jnp.ones((D,), dtype=jnp.float32)
    bias = jnp.zeros((D,), dtype=jnp.float32)

    out = encoder_forward(x, src_mask, eps=1e-6, alpha=alpha, bias=bias)
    out = jax.block_until_ready(out)

    ref = _reference(x)
    assert out.shape == (B, S, D)
    assert jnp.allclose(out, ref, atol=1e-5, rtol=1e-5)

    # Second small check at a lane-dense d_model to exercise row tiling.
    B2, S2, D2 = 2, 16, 128
    x2 = jax.random.normal(jax.random.PRNGKey(1), (B2, S2, D2), dtype=jnp.float32)
    out2 = jax.block_until_ready(encoder_forward(x2, eps=1e-6))
    assert jnp.allclose(out2, _reference(x2), atol=1e-5, rtol=1e-5)

    print("KERNEL_OK")
</pallas_src>

<mosaic_0001>
module attributes {stable_mosaic.version = 11 : i64} {
  func.func @layernorm_kernel(%arg0: i32, %arg1: memref<16x32xf32, #tpu.memory_space<vmem>>, %arg2: memref<16x32xf32, #tpu.memory_space<vmem>>) attributes {dimension_semantics = [#tpu.dimension_semantics<parallel>], iteration_bounds = array<i64: 1>, scalar_prefetch = 0 : i64, scratch_operands = 0 : i64, tpu.core_type = #tpu.core_type<tc>, window_params = [{transform_indices = @transform_0, window_bounds = array<i64: 16, 32>}, {transform_indices = @transform_1, window_bounds = array<i64: 16, 32>}]} {
    %c0 = arith.constant 0 : index
    %c0_0 = arith.constant 0 : index
    %0 = vector.load %arg1[%c0, %c0_0] : memref<16x32xf32, #tpu.memory_space<vmem>>, vector<16x32xf32>
    %cst = arith.constant dense<0.000000e+00> : vector<16xf32>
    %1 = vector.multi_reduction <add>, %0, %cst [1] : vector<16x32xf32> to vector<16xf32>
    %2 = vector.shape_cast %1 : vector<16xf32> to vector<16x1xf32>
    %3 = arith.mulf %0, %0 : vector<16x32xf32>
    %cst_1 = arith.constant dense<0.000000e+00> : vector<16xf32>
    %4 = vector.multi_reduction <add>, %3, %cst_1 [1] : vector<16x32xf32> to vector<16xf32>
    %5 = vector.shape_cast %4 : vector<16xf32> to vector<16x1xf32>
    %cst_2 = arith.constant 3.125000e-02 : f32
    %6 = vector.broadcast %cst_2 : f32 to vector<16x1xf32>
    %7 = arith.mulf %2, %6 : vector<16x1xf32>
    %8 = arith.mulf %2, %7 : vector<16x1xf32>
    %9 = arith.subf %5, %8 : vector<16x1xf32>
    %cst_3 = arith.constant 0.0322580636 : f32
    %10 = vector.broadcast %cst_3 : f32 to vector<16x1xf32>
    %11 = arith.mulf %9, %10 : vector<16x1xf32>
    %12 = vector.broadcast %7 : vector<16x1xf32> to vector<16x32xf32>
    %13 = arith.subf %0, %12 : vector<16x32xf32>
    %cst_4 = arith.constant 9.99999997E-7 : f32
    %14 = vector.broadcast %cst_4 : f32 to vector<16x1xf32>
    %15 = arith.addf %11, %14 : vector<16x1xf32>
    %16 = math.rsqrt %15 : vector<16x1xf32>
    %17 = vector.broadcast %16 : vector<16x1xf32> to vector<16x32xf32>
    %18 = arith.mulf %13, %17 : vector<16x32xf32>
    %c0_5 = arith.constant 0 : index
    %c0_6 = arith.constant 0 : index
    %19 = vector.load %arg2[%c0_5, %c0_6] : memref<16x32xf32, #tpu.memory_space<vmem>>, vector<16x32xf32>
    tpu.vector_store %arg2[%c0_5, %c0_6], %18 {strides = array<i32>} : memref<16x32xf32, #tpu.memory_space<vmem>>, vector<16x32xf32>,
    return
  }
  func.func @transform_0(%arg0: i32) -> (i32, i32) {
    %c0_i32 = arith.constant 0 : i32
    %c0_i32_0 = arith.constant 0 : i32
    return %arg0, %c0_i32 : i32, i32
  }
  func.func @transform_1(%arg0: i32) -> (i32, i32) {
    %c0_i32 = arith.constant 0 : i32
    %c0_i32_0 = arith.constant 0 : i32
    return %arg0, %c0_i32 : i32, i32
  }
}

</mosaic_0001>

<llo_original>
// kernel: encoder_forward.1
$region0: #{encoder_forward.1}
  #allocation0 [shape = 'u32[]', space=smem, size = 0x4, offset = 0x4, fixed_abs, tag = 'smem constant byte address 0x4 - core index']
  #allocation1 [shape = 'u32[144,128]{1,0:T(1,128)}', space=vmem, size = 0x12000, scoped, tag = 'internal scratch']
  %s0 = inlined_call_operand.hbm [shape: f32[16,32], index: 0, kind: input, shape index: {}]
  %s1 = inlined_call_operand.hbm [shape: f32[16,32], index: 1, kind: output, shape index: {}]
  %s2 = sld [smem:[#allocation0]]
  $region18: #{encoder_forward.1} parent=0
    _
  %s4 = ssub.s32 1, %s2
  %s5 = scalar_select 0, %s4, %s2
  $region1: #{encoder_forward.1} parent=0
    #allocation2 [shape = 'u8[8192]{0}', space=vmem, size = 0x2000, scoped, tag = 'input window, operand 0, single buffered']
    #allocation3 [shape = 's32[1]{0}', space=sflag, size = 0x4, scoped, tag = 'scoped memory for encoder_forward.1']
    #allocation4 [shape = 's32[1]{0}', space=sflag, size = 0x4, scoped, tag = 'scoped memory for encoder_forward.1']
    #allocation5 [shape = 'u8[8192]{0}', space=vmem, size = 0x2000, scoped, tag = 'output window, operand 0, single buffered']
    %6 = vsyncpa [#allocation3], 0
    %7 = vsyncpa [#allocation4], 0
    // Predicated region
    $region2: #{encoder_forward.1} parent=1 // pred_check
      _
    $region3: #{encoder_forward.1} parent=1 // pred_check_branch
      %9 = sbr.rel (0) target = $region5
    $region4: #{encoder_forward.1} parent=1 // pred_region
      %s11 = ssub.s32 256, 256
      %12 = vsyncadd [#allocation3], %s11
      %s13 = sshll.u32 [#allocation2], 4
      %s14 = int_to_ptr.vmem [resolvable:$true] %s13
      %19 = dma.hbm_to_vmem [thread:$0]  %s0, 256, %s14, [#allocation3], 128, 128, 8
    $region5: #{encoder_forward.1} parent=1 // pred_fallthru
      _
    // Predicated region
    $region6: #{encoder_forward.1} parent=1 // pred_check
      _
    $region7: #{encoder_forward.1} parent=1 // pred_check_branch
      %21 = sbr.rel (0) target = $region9
    $region8: #{encoder_forward.1} parent=1 // pred_region
      %22 = dma.done [#allocation3], 256
    $region9: #{encoder_forward.1} parent=1 // pred_fallthru
      _
    %v23 = vld [vmem:[#allocation2] sm:$0xff]
    %v24 = vld [vmem:[#allocation2 + $0x8] sm:$0xff]
    %vm25 = vcmask 261120
    %v26 = vsel %vm25, %v23, 0.0
    %27 = vadd.xlane.f32.xlu0 %v26
    %v28 = vpop.xlane.xlu0 %27
    %v29 = vsel %vm25, %v24, 0.0
    %30 = vadd.xlane.f32.xlu0 %v29
    %v31 = vpop.xlane.xlu0 %30
    %v32 = vmul.f32 %v23, %v23
    %v33 = vmul.f32 %v24, %v24
    %v34 = vsel %vm25, %v32, 0.0
    %35 = vadd.xlane.f32.xlu0 %v34
    %v36 = vpop.xlane.xlu0 %35
    %v37 = vsel %vm25, %v33, 0.0
    %38 = vadd.xlane.f32.xlu0 %v37
    %v39 = vpop.xlane.xlu0 %38
    %v40 = vmul.f32 %v28, 0.03125
    %v41 = vmul.f32 %v31, 0.03125
    %v42 = vmul.f32 %v28, %v40
    %v43 = vmul.f32 %v31, %v41
    %v44 = vsub.f32 %v36, %v42
    %v45 = vsub.f32 %v39, %v43
    %v46 = vmul.f32 %v44, 0.032258064
    %v47 = vmul.f32 %v45, 0.032258064
    %v48 = vsub.f32 %v23, %v40
    %v49 = vsub.f32 %v24, %v41
    %v50 = vadd.f32 %v46, 1e-06
    %v51 = vadd.f32 %v47, 1e-06
    %v52 = vrsqrt.pop %v50
    %v53 = vrsqrt.pop %v51
    %v54 = vmul.f32 %v48, %v52
    %v55 = vmul.f32 %v49, %v53
    %56 = vst.msk [vmem:[#allocation5] sm:$0xff] %vm25, %v54
    %57 = vst.msk [vmem:[#allocation5 + $0x8] sm:$0xff] %vm25, %v55
    // Predicated region
    $region10: #{encoder_forward.1} parent=1 // pred_check
      _
    $region11: #{encoder_forward.1} parent=1 // pred_check_branch
      %59 = sbr.rel (0) target = $region13
    $region12: #{encoder_forward.1} parent=1 // pred_region
      %s61 = ssub.s32 256, 256
      %62 = vsyncadd [#allocation4], %s61
      %s63 = sshll.u32 [#allocation5], 4
      %s64 = int_to_ptr.vmem [resolvable:$true] %s63
      %69 = dma.vmem_to_hbm [thread:$0]  %s64, 256, %s1, [#allocation4], 128, 128, 8
    $region13: #{encoder_forward.1} parent=1 // pred_fallthru
      _
    // Predicated region
    $region14: #{encoder_forward.1} parent=1 // pred_check
      _
    $region15: #{encoder_forward.1} parent=1 // pred_check_branch
      %71 = sbr.rel (0) target = $region17
    $region16: #{encoder_forward.1} parent=1 // pred_region
      %72 = dma.done [#allocation4], 256
    $region17: #{encoder_forward.1} parent=1 // pred_fallthru
      _
    %73 = vsyncpa [#allocation3], 1
    %74 = vsyncpa [#allocation4], 1

</llo_original>
